<compile_context>
chip_gen: v7x
topology: tpu7x:2x2x1
jax: 0.10.0
libtpu: 0.0.40
codegen_flags: <defaults>
</compile_context>

<pallas_src>
import functools
from collections import defaultdict

import numpy as np

import jax
import jax.numpy as jnp
from jax import lax
from jax.experimental import pallas as pl
from jax.experimental.pallas import tpu as pltpu


W_NAMES = ['dense', 'fcnn', 'core', 'conv']


# ----------------------------- Pallas kernel -------------------------------

def _sim_param_loss_kernel(w_ref, out_ref, *, groups, num_layers):
    """w_ref: (L, I_pad, TILE_M) VMEM tile of the stacked watched weights.
    out_ref: (1, TILE_M).  `groups` is a static tuple
    (left_layer, ((right_layer, gamma*reg/cnt), ...)) specialized at trace time."""
    eps2 = jnp.float32(1e-16)          # (torch cosine_similarity eps = 1e-8)^2
    tile_m = out_ref.shape[-1]

    # Per-layer sums of squares over the reduction (sublane) axis, computed once
    # per tile and kept as values (no VMEM scratch, no reloads).
    sumsq = []
    for l in range(num_layers):
        wl = w_ref[l]                                            # static slice
        sumsq.append(jnp.sum(wl * wl, axis=0, keepdims=True))    # (1, TILE_M)

    acc = jnp.zeros((1, tile_m), jnp.float32)
    # Static pair structure grouped by the left layer: the left slab is loaded
    # once per group and reused across all of its right-hand partners.
    # TODO(synk): for very large models (hundreds of pairs) switch this full
    # static unroll back to a scalar-prefetched fori_loop with bounded unroll.
    for i, partners in groups:
        a = w_ref[i]                                             # (I_pad, TILE_M)
        ss_i = sumsq[i]
        for j, g in partners:
            dot = jnp.sum(a * w_ref[j], axis=0, keepdims=True)   # (1, TILE_M)
            # torch clamps the *product* of norms by eps:
            #   cos = dot / sqrt(max(ss_i * ss_j, eps^2))
            cos = dot * lax.rsqrt(jnp.maximum(ss_i * sumsq[j], eps2))   # rsqrt -> EUP
            acc = acc + jnp.float32(g) * cos     # g already includes reg / cnt
    out_ref[...] = acc


def _choose_tile_and_vmem(L, I_pad, M128):
    """Pick a lane-tile width and a vmem limit from the device's VMEM capacity."""
    try:
        vmem_cap = int(pltpu.get_tpu_info().vmem_capacity_bytes)
    except Exception:
        vmem_cap = 64 * 1024 * 1024          # v7x per-TensorCore (smallest case)

    # Budget ~3/8 of VMEM for the double-buffered (L, I_pad, tile_m) input block.
    budget = (vmem_cap * 3) // 8
    bytes_per_lane = 2 * L * I_pad * 4       # double-buffered f32 input, per lane
    cap = (budget // bytes_per_lane) // 128 * 128
    cap = max(128, min(2048, cap))
    tile_m = min(cap, M128)

    # Prefer >= 2 grid steps so the "parallel" M axis can shard across the two
    # v7x TensorCores (only possible when M spans more than one 128-lane tile).
    if M128 >= 256 and -(-M128 // tile_m) < 2:
        tile_m = min(cap, max(128, (M128 // 2) // 128 * 128))

    footprint = 2 * L * I_pad * tile_m * 4 + 2 * tile_m * 4   # dbuf input + dbuf out
    vmem_limit = max(16 << 20, footprint + (8 << 20))
    vmem_limit = min(vmem_limit, (vmem_cap * 3) // 4)         # leave compiler headroom
    vmem_limit = max(vmem_limit, footprint + (2 << 20))
    return tile_m, int(vmem_limit)


def _sim_param_loss_pallas(weights_lim, groups, tile_m, vmem_limit):
    """weights_lim: (L, I_pad, M_pad) f32 stacked watched weights.
    Returns (1, M_pad) f32 accumulated weighted cosine similarity."""
    L, I_pad, M_pad = weights_lim.shape
    nm = M_pad // tile_m
    num_pairs = sum(len(js) for _, js in groups)

    kernel = functools.partial(_sim_param_loss_kernel, groups=groups, num_layers=L)

    cost = pl.CostEstimate(
        flops=int(3 * L * I_pad * M_pad + 4 * num_pairs * I_pad * M_pad),
        transcendentals=int(num_pairs * M_pad),
        bytes_accessed=int(weights_lim.size * 4 + M_pad * 4),
    )

    return pl.pallas_call(
        kernel,
        out_shape=jax.ShapeDtypeStruct((1, M_pad), jnp.float32),
        grid_spec=pltpu.PrefetchScalarGridSpec(
            num_scalar_prefetch=0,
            grid=(nm,),
            in_specs=[pl.BlockSpec((L, I_pad, tile_m), lambda m: (0, 0, m))],
            out_specs=pl.BlockSpec((1, tile_m), lambda m: (0, m)),
        ),
        compiler_params=pltpu.CompilerParams(
            dimension_semantics=("parallel",),   # M tiles are independent
            vmem_limit_bytes=vmem_limit,
        ),
        cost_estimate=cost,
    )(weights_lim)


# ----------------------------- Python glue ---------------------------------

def sim_param_loss(named_params, num_layers, reg=1.0, constraint='exp'):
    """named_params: list of (name, weight (O, I, kH, kW)). Returns (O, kH, kW) loss."""
    # Host-side gamma (numpy) -- no device->host syncs in the pair loop.
    idx = np.arange(num_layers, dtype=np.float64)
    gamma_np = np.exp(-idx) if constraint else idx

    # Pair / count bookkeeping is name-matching glue (done in Python, as in torch).
    pairs = []
    cnt = 0.0
    for i, (f_name, _) in enumerate(named_params):
        for j, (s_name, _) in enumerate(named_params[i:]):
            for w_name in W_NAMES:
                if w_name in f_name and w_name in s_name:
                    pairs.append((i, i + j, float(gamma_np[abs(j - i)])))
                    cnt += 1.0
    if cnt == 0:
        return jnp.float32(0.0)

    # Only layers that participate in at least one pair are stacked / shipped.
    used = sorted({p[0] for p in pairs} | {p[1] for p in pairs})
    remap = {orig: k for k, orig in enumerate(used)}
    scale = reg / cnt

    grouped = defaultdict(list)
    for a, b, g in pairs:
        grouped[remap[a]].append((remap[b], g * scale))   # fold reg/cnt into gamma
    groups = tuple((i, tuple(grouped[i])) for i in sorted(grouped))

    ws = [named_params[k][1] for k in used]
    # TODO(synk): assumes all watched parameters share an identical (O, I, kH, kW);
    # mixed shapes would need per-shape buckets.
    O, I, kH, kW = ws[0].shape
    M = O * kH * kW
    L = len(ws)

    # TODO(synk): this relayout (transpose + reshape + pad) re-reads every watched
    # weight from HBM before the kernel; a real model should expose weights in
    # (I, O*kH*kW) layout or keep a persistent padded buffer to avoid the extra pass.
    stacked = jnp.stack(
        [jnp.transpose(w, (1, 0, 2, 3)).reshape(I, M) for w in ws], axis=0)

    # Pad sublane axis (I) to a multiple of 8 and lane axis (M) to a lane-dense
    # multiple of tile_m.  Zero padding is exact for cosine similarity (adds 0 to
    # dots and to sums of squares).
    I_pad = -(-I // 8) * 8
    M128 = -(-M // 128) * 128
    tile_m, vmem_limit = _choose_tile_and_vmem(L, I_pad, M128)
    M_pad = -(-M128 // tile_m) * tile_m
    stacked = jnp.pad(stacked, ((0, 0), (0, I_pad - I), (0, M_pad - M)))

    out = _sim_param_loss_pallas(stacked, groups, tile_m, vmem_limit)
    return out[0, :M].reshape(O, kH, kW)


def sim_param_loss_ref(named_params, num_layers, reg=1.0, constraint='exp'):
    """Pure-JAX reference (mirrors torch F.cosine_similarity along dim=1)."""
    layers = jnp.arange(num_layers, dtype=jnp.float32)
    gamma = jnp.exp(-layers) if constraint else layers

    def cos_dim1(a, b, eps=1e-8):
        dot = jnp.sum(a * b, axis=1)
        ssa = jnp.sum(a * a, axis=1)
        ssb = jnp.sum(b * b, axis=1)
        # torch F.cosine_similarity clamps the product of norms by eps.
        return dot / jnp.sqrt(jnp.maximum(ssa * ssb, eps * eps))

    loss, cnt = 0.0, 0.0
    for i, (f_name, f_w) in enumerate(named_params):
        for j, (s_name, s_w) in enumerate(named_params[i:]):
            for w_name in W_NAMES:
                if w_name in f_name and w_name in s_name:
                    loss = loss + gamma[abs(j - i)] * cos_dim1(f_w, s_w)
                    cnt += 1.0
    return loss / cnt * reg if cnt != 0 else jnp.float32(0.0)


# --------------------------------- main -------------------------------------

if __name__ == "__main__":
    num_layers = 4
    O, I, kH, kW = 8, 4, 3, 3          # small conv-weight shapes (same per layer)

    key = jax.random.PRNGKey(0)
    named_params = []
    for l in range(num_layers):
        key, sub = jax.random.split(key)
        w = jax.random.normal(sub, (O, I, kH, kW), dtype=jnp.float32) * 0.1
        named_params.append((f"conv{l + 1}.weight", w))

    out = sim_param_loss(named_params, num_layers, reg=1.0, constraint='exp')
    out = jax.block_until_ready(out)

    ref = sim_param_loss_ref(named_params, num_layers, reg=1.0, constraint='exp')
    assert out.shape == (O, kH, kW)
    assert jnp.allclose(out, ref, atol=1e-5, rtol=1e-5)

    print("KERNEL_OK")
</pallas_src>

<mosaic_0001>
module attributes {stable_mosaic.version = 11 : i64} {
  func.func @_sim_param_loss_kernel(%arg0: i32, %arg1: memref<4x8x128xf32, #tpu.memory_space<vmem>>, %arg2: memref<1x128xf32, #tpu.memory_space<vmem>>) attributes {dimension_semantics = [#tpu.dimension_semantics<parallel>], iteration_bounds = array<i64: 1>, scalar_prefetch = 0 : i64, scratch_operands = 0 : i64, tpu.core_type = #tpu.core_type<tc>, window_params = [{transform_indices = @transform_0, window_bounds = array<i64: 4, 8, 128>}, {transform_indices = @transform_1, window_bounds = array<i64: 1, 128>}]} {
    %c0 = arith.constant 0 : index
    %c0_0 = arith.constant 0 : index
    %c0_1 = arith.constant 0 : index
    %0 = vector.load %arg1[%c0, %c0_0, %c0_1] : memref<4x8x128xf32, #tpu.memory_space<vmem>>, vector<1x8x128xf32>
    %1 = vector.shape_cast %0 : vector<1x8x128xf32> to vector<8x128xf32>
    %2 = arith.mulf %1, %1 : vector<8x128xf32>
    %cst = arith.constant dense<0.000000e+00> : vector<128xf32>
    %3 = vector.multi_reduction <add>, %2, %cst [0] : vector<8x128xf32> to vector<128xf32>
    %4 = vector.shape_cast %3 : vector<128xf32> to vector<1x128xf32>
    %c1 = arith.constant 1 : index
    %c0_2 = arith.constant 0 : index
    %c0_3 = arith.constant 0 : index
    %5 = vector.load %arg1[%c1, %c0_2, %c0_3] : memref<4x8x128xf32, #tpu.memory_space<vmem>>, vector<1x8x128xf32>
    %6 = vector.shape_cast %5 : vector<1x8x128xf32> to vector<8x128xf32>
    %7 = arith.mulf %6, %6 : vector<8x128xf32>
    %cst_4 = arith.constant dense<0.000000e+00> : vector<128xf32>
    %8 = vector.multi_reduction <add>, %7, %cst_4 [0] : vector<8x128xf32> to vector<128xf32>
    %9 = vector.shape_cast %8 : vector<128xf32> to vector<1x128xf32>
    %c2 = arith.constant 2 : index
    %c0_5 = arith.constant 0 : index
    %c0_6 = arith.constant 0 : index
    %10 = vector.load %arg1[%c2, %c0_5, %c0_6] : memref<4x8x128xf32, #tpu.memory_space<vmem>>, vector<1x8x128xf32>
    %11 = vector.shape_cast %10 : vector<1x8x128xf32> to vector<8x128xf32>
    %12 = arith.mulf %11, %11 : vector<8x128xf32>
    %cst_7 = arith.constant dense<0.000000e+00> : vector<128xf32>
    %13 = vector.multi_reduction <add>, %12, %cst_7 [0] : vector<8x128xf32> to vector<128xf32>
    %14 = vector.shape_cast %13 : vector<128xf32> to vector<1x128xf32>
    %c3 = arith.constant 3 : index
    %c0_8 = arith.constant 0 : index
    %c0_9 = arith.constant 0 : index
    %15 = vector.load %arg1[%c3, %c0_8, %c0_9] : memref<4x8x128xf32, #tpu.memory_space<vmem>>, vector<1x8x128xf32>
    %16 = vector.shape_cast %15 : vector<1x8x128xf32> to vector<8x128xf32>
    %17 = arith.mulf %16, %16 : vector<8x128xf32>
    %cst_10 = arith.constant dense<0.000000e+00> : vector<128xf32>
    %18 = vector.multi_reduction <add>, %17, %cst_10 [0] : vector<8x128xf32> to vector<128xf32>
    %19 = vector.shape_cast %18 : vector<128xf32> to vector<1x128xf32>
    %cst_11 = arith.constant 0.000000e+00 : f32
    %20 = vector.broadcast %cst_11 : f32 to vector<1x128xf32>
    %c0_12 = arith.constant 0 : index
    %c0_13 = arith.constant 0 : index
    %c0_14 = arith.constant 0 : index
    %21 = vector.load %arg1[%c0_12, %c0_13, %c0_14] : memref<4x8x128xf32, #tpu.memory_space<vmem>>, vector<1x8x128xf32>
    %22 = vector.shape_cast %21 : vector<1x8x128xf32> to vector<8x128xf32>
    %c0_15 = arith.constant 0 : index
    %c0_16 = arith.constant 0 : index
    %c0_17 = arith.constant 0 : index
    %23 = vector.load %arg1[%c0_15, %c0_16, %c0_17] : memref<4x8x128xf32, #tpu.memory_space<vmem>>, vector<1x8x128xf32>
    %24 = vector.shape_cast %23 : vector<1x8x128xf32> to vector<8x128xf32>
    %25 = arith.mulf %22, %24 : vector<8x128xf32>
    %cst_18 = arith.constant dense<0.000000e+00> : vector<128xf32>
    %26 = vector.multi_reduction <add>, %25, %cst_18 [0] : vector<8x128xf32> to vector<128xf32>
    %27 = vector.shape_cast %26 : vector<128xf32> to vector<1x128xf32>
    %28 = arith.mulf %4, %4 : vector<1x128xf32>
    %cst_19 = arith.constant 1.000000e-16 : f32
    %29 = vector.broadcast %cst_19 : f32 to vector<1x128xf32>
    %30 = arith.maximumf %28, %29 : vector<1x128xf32>
    %31 = math.rsqrt %30 : vector<1x128xf32>
    %32 = arith.mulf %27, %31 : vector<1x128xf32>
    %cst_20 = arith.constant 1.000000e-01 : f32
    %33 = vector.broadcast %cst_20 : f32 to vector<1x128xf32>
    %34 = arith.mulf %33, %32 : vector<1x128xf32>
    %35 = arith.addf %20, %34 : vector<1x128xf32>
    %c1_21 = arith.constant 1 : index
    %c0_22 = arith.constant 0 : index
    %c0_23 = arith.constant 0 : index
    %36 = vector.load %arg1[%c1_21, %c0_22, %c0_23] : memref<4x8x128xf32, #tpu.memory_space<vmem>>, vector<1x8x128xf32>
    %37 = vector.shape_cast %36 : vector<1x8x128xf32> to vector<8x128xf32>
    %38 = arith.mulf %22, %37 : vector<8x128xf32>
    %cst_24 = arith.constant dense<0.000000e+00> : vector<128xf32>
    %39 = vector.multi_reduction <add>, %38, %cst_24 [0] : vector<8x128xf32> to vector<128xf32>
    %40 = vector.shape_cast %39 : vector<128xf32> to vector<1x128xf32>
    %41 = arith.mulf %4, %9 : vector<1x128xf32>
    %cst_25 = arith.constant 1.000000e-16 : f32
    %42 = vector.broadcast %cst_25 : f32 to vector<1x128xf32>
    %43 = arith.maximumf %41, %42 : vector<1x128xf32>
    %44 = math.rsqrt %43 : vector<1x128xf32>
    %45 = arith.mulf %40, %44 : vector<1x128xf32>
    %cst_26 = arith.constant 0.0367879458 : f32
    %46 = vector.broadcast %cst_26 : f32 to vector<1x128xf32>
    %47 = arith.mulf %46, %45 : vector<1x128xf32>
    %48 = arith.addf %35, %47 : vector<1x128xf32>
    %c2_27 = arith.constant 2 : index
    %c0_28 = arith.constant 0 : index
    %c0_29 = arith.constant 0 : index
    %49 = vector.load %arg1[%c2_27, %c0_28, %c0_29] : memref<4x8x128xf32, #tpu.memory_space<vmem>>, vector<1x8x128xf32>
    %50 = vector.shape_cast %49 : vector<1x8x128xf32> to vector<8x128xf32>
    %51 = arith.mulf %22, %50 : vector<8x128xf32>
    %cst_30 = arith.constant dense<0.000000e+00> : vector<128xf32>
    %52 = vector.multi_reduction <add>, %51, %cst_30 [0] : vector<8x128xf32> to vector<128xf32>
    %53 = vector.shape_cast %52 : vector<128xf32> to vector<1x128xf32>
    %54 = arith.mulf %4, %14 : vector<1x128xf32>
    %cst_31 = arith.constant 1.000000e-16 : f32
    %55 = vector.broadcast %cst_31 : f32 to vector<1x128xf32>
    %56 = arith.maximumf %54, %55 : vector<1x128xf32>
    %57 = math.rsqrt %56 : vector<1x128xf32>
    %58 = arith.mulf %53, %57 : vector<1x128xf32>
    %cst_32 = arith.constant 0.013533528 : f32
    %59 = vector.broadcast %cst_32 : f32 to vector<1x128xf32>
    %60 = arith.mulf %59, %58 : vector<1x128xf32>
    %61 = arith.addf %48, %60 : vector<1x128xf32>
    %c3_33 = arith.constant 3 : index
    %c0_34 = arith.constant 0 : index
    %c0_35 = arith.constant 0 : index
    %62 = vector.load %arg1[%c3_33, %c0_34, %c0_35] : memref<4x8x128xf32, #tpu.memory_space<vmem>>, vector<1x8x128xf32>
    %63 = vector.shape_cast %62 : vector<1x8x128xf32> to vector<8x128xf32>
    %64 = arith.mulf %22, %63 : vector<8x128xf32>
    %cst_36 = arith.constant dense<0.000000e+00> : vector<128xf32>
    %65 = vector.multi_reduction <add>, %64, %cst_36 [0] : vector<8x128xf32> to vector<128xf32>
    %66 = vector.shape_cast %65 : vector<128xf32> to vector<1x128xf32>
    %67 = arith.mulf %4, %19 : vector<1x128xf32>
    %cst_37 = arith.constant 1.000000e-16 : f32
    %68 = vector.broadcast %cst_37 : f32 to vector<1x128xf32>
    %69 = arith.maximumf %67, %68 : vector<1x128xf32>
    %70 = math.rsqrt %69 : vector<1x128xf32>
    %71 = arith.mulf %66, %70 : vector<1x128xf32>
    %cst_38 = arith.constant 0.00497870706 : f32
    %72 = vector.broadcast %cst_38 : f32 to vector<1x128xf32>
    %73 = arith.mulf %72, %71 : vector<1x128xf32>
    %74 = arith.addf %61, %73 : vector<1x128xf32>
    %c1_39 = arith.constant 1 : index
    %c0_40 = arith.constant 0 : index
    %c0_41 = arith.constant 0 : index
    %75 = vector.load %arg1[%c1_39, %c0_40, %c0_41] : memref<4x8x128xf32, #tpu.memory_space<vmem>>, vector<1x8x128xf32>
    %76 = vector.shape_cast %75 : vector<1x8x128xf32> to vector<8x128xf32>
    %c1_42 = arith.constant 1 : index
    %c0_43 = arith.constant 0 : index
    %c0_44 = arith.constant 0 : index
    %77 = vector.load %arg1[%c1_42, %c0_43, %c0_44] : memref<4x8x128xf32, #tpu.memory_space<vmem>>, vector<1x8x128xf32>
    %78 = vector.shape_cast %77 : vector<1x8x128xf32> to vector<8x128xf32>
    %79 = arith.mulf %76, %78 : vector<8x128xf32>
    %cst_45 = arith.constant dense<0.000000e+00> : vector<128xf32>
    %80 = vector.multi_reduction <add>, %79, %cst_45 [0] : vector<8x128xf32> to vector<128xf32>
    %81 = vector.shape_cast %80 : vector<128xf32> to vector<1x128xf32>
    %82 = arith.mulf %9, %9 : vector<1x128xf32>
    %cst_46 = arith.constant 1.000000e-16 : f32
    %83 = vector.broadcast %cst_46 : f32 to vector<1x128xf32>
    %84 = arith.maximumf %82, %83 : vector<1x128xf32>
    %85 = math.rsqrt %84 : vector<1x128xf32>
    %86 = arith.mulf %81, %85 : vector<1x128xf32>
    %cst_47 = arith.constant 0.0367879458 : f32
    %87 = vector.broadcast %cst_47 : f32 to vector<1x128xf32>
    %88 = arith.mulf %87, %86 : vector<1x128xf32>
    %89 = arith.addf %74, %88 : vector<1x128xf32>
    %c2_48 = arith.constant 2 : index
    %c0_49 = arith.constant 0 : index
    %c0_50 = arith.constant 0 : index
    %90 = vector.load %arg1[%c2_48, %c0_49, %c0_50] : memref<4x8x128xf32, #tpu.memory_space<vmem>>, vector<1x8x128xf32>
    %91 = vector.shape_cast %90 : vector<1x8x128xf32> to vector<8x128xf32>
    %92 = arith.mulf %76, %91 : vector<8x128xf32>
    %cst_51 = arith.constant dense<0.000000e+00> : vector<128xf32>
    %93 = vector.multi_reduction <add>, %92, %cst_51 [0] : vector<8x128xf32> to vector<128xf32>
    %94 = vector.shape_cast %93 : vector<128xf32> to vector<1x128xf32>
    %95 = arith.mulf %9, %14 : vector<1x128xf32>
    %cst_52 = arith.constant 1.000000e-16 : f32
    %96 = vector.broadcast %cst_52 : f32 to vector<1x128xf32>
    %97 = arith.maximumf %95, %96 : vector<1x128xf32>
    %98 = math.rsqrt %97 : vector<1x128xf32>
    %99 = arith.mulf %94, %98 : vector<1x128xf32>
    %cst_53 = arith.constant 1.000000e-01 : f32
    %100 = vector.broadcast %cst_53 : f32 to vector<1x128xf32>
    %101 = arith.mulf %100, %99 : vector<1x128xf32>
    %102 = arith.addf %89, %101 : vector<1x128xf32>
    %c3_54 = arith.constant 3 : index
    %c0_55 = arith.constant 0 : index
    %c0_56 = arith.constant 0 : index
    %103 = vector.load %arg1[%c3_54, %c0_55, %c0_56] : memref<4x8x128xf32, #tpu.memory_space<vmem>>, vector<1x8x128xf32>
    %104 = vector.shape_cast %103 : vector<1x8x128xf32> to vector<8x128xf32>
    %105 = arith.mulf %76, %104 : vector<8x128xf32>
    %cst_57 = arith.constant dense<0.000000e+00> : vector<128xf32>
    %106 = vector.multi_reduction <add>, %105, %cst_57 [0] : vector<8x128xf32> to vector<128xf32>
    %107 = vector.shape_cast %106 : vector<128xf32> to vector<1x128xf32>
    %108 = arith.mulf %9, %19 : vector<1x128xf32>
    %cst_58 = arith.constant 1.000000e-16 : f32
    %109 = vector.broadcast %cst_58 : f32 to vector<1x128xf32>
    %110 = arith.maximumf %108, %109 : vector<1x128xf32>
    %111 = math.rsqrt %110 : vector<1x128xf32>
    %112 = arith.mulf %107, %111 : vector<1x128xf32>
    %cst_59 = arith.constant 0.0367879458 : f32
    %113 = vector.broadcast %cst_59 : f32 to vector<1x128xf32>
    %114 = arith.mulf %113, %112 : vector<1x128xf32>
    %115 = arith.addf %102, %114 : vector<1x128xf32>
    %c2_60 = arith.constant 2 : index
    %c0_61 = arith.constant 0 : index
    %c0_62 = arith.constant 0 : index
    %116 = vector.load %arg1[%c2_60, %c0_61, %c0_62] : memref<4x8x128xf32, #tpu.memory_space<vmem>>, vector<1x8x128xf32>
    %117 = vector.shape_cast %116 : vector<1x8x128xf32> to vector<8x128xf32>
    %c2_63 = arith.constant 2 : index
    %c0_64 = arith.constant 0 : index
    %c0_65 = arith.constant 0 : index
    %118 = vector.load %arg1[%c2_63, %c0_64, %c0_65] : memref<4x8x128xf32, #tpu.memory_space<vmem>>, vector<1x8x128xf32>
    %119 = vector.shape_cast %118 : vector<1x8x128xf32> to vector<8x128xf32>
    %120 = arith.mulf %117, %119 : vector<8x128xf32>
    %cst_66 = arith.constant dense<0.000000e+00> : vector<128xf32>
    %121 = vector.multi_reduction <add>, %120, %cst_66 [0] : vector<8x128xf32> to vector<128xf32>
    %122 = vector.shape_cast %121 : vector<128xf32> to vector<1x128xf32>
    %123 = arith.mulf %14, %14 : vector<1x128xf32>
    %cst_67 = arith.constant 1.000000e-16 : f32
    %124 = vector.broadcast %cst_67 : f32 to vector<1x128xf32>
    %125 = arith.maximumf %123, %124 : vector<1x128xf32>
    %126 = math.rsqrt %125 : vector<1x128xf32>
    %127 = arith.mulf %122, %126 : vector<1x128xf32>
    %cst_68 = arith.constant 0.013533528 : f32
    %128 = vector.broadcast %cst_68 : f32 to vector<1x128xf32>
    %129 = arith.mulf %128, %127 : vector<1x128xf32>
    %130 = arith.addf %115, %129 : vector<1x128xf32>
    %c3_69 = arith.constant 3 : index
    %c0_70 = arith.constant 0 : index
    %c0_71 = arith.constant 0 : index
    %131 = vector.load %arg1[%c3_69, %c0_70, %c0_71] : memref<4x8x128xf32, #tpu.memory_space<vmem>>, vector<1x8x128xf32>
    %132 = vector.shape_cast %131 : vector<1x8x128xf32> to vector<8x128xf32>
    %133 = arith.mulf %117, %132 : vector<8x128xf32>
    %cst_72 = arith.constant dense<0.000000e+00> : vector<128xf32>
    %134 = vector.multi_reduction <add>, %133, %cst_72 [0] : vector<8x128xf32> to vector<128xf32>
    %135 = vector.shape_cast %134 : vector<128xf32> to vector<1x128xf32>
    %136 = arith.mulf %14, %19 : vector<1x128xf32>
    %cst_73 = arith.constant 1.000000e-16 : f32
    %137 = vector.broadcast %cst_73 : f32 to vector<1x128xf32>
    %138 = arith.maximumf %136, %137 : vector<1x128xf32>
    %139 = math.rsqrt %138 : vector<1x128xf32>
    %140 = arith.mulf %135, %139 : vector<1x128xf32>
    %cst_74 = arith.constant 0.0367879458 : f32
    %141 = vector.broadcast %cst_74 : f32 to vector<1x128xf32>
    %142 = arith.mulf %141, %140 : vector<1x128xf32>
    %143 = arith.addf %130, %142 : vector<1x128xf32>
    %c3_75 = arith.constant 3 : index
    %c0_76 = arith.constant 0 : index
    %c0_77 = arith.constant 0 : index
    %144 = vector.load %arg1[%c3_75, %c0_76, %c0_77] : memref<4x8x128xf32, #tpu.memory_space<vmem>>, vector<1x8x128xf32>
    %145 = vector.shape_cast %144 : vector<1x8x128xf32> to vector<8x128xf32>
    %c3_78 = arith.constant 3 : index
    %c0_79 = arith.constant 0 : index
    %c0_80 = arith.constant 0 : index
    %146 = vector.load %arg1[%c3_78, %c0_79, %c0_80] : memref<4x8x128xf32, #tpu.memory_space<vmem>>, vector<1x8x128xf32>
    %147 = vector.shape_cast %146 : vector<1x8x128xf32> to vector<8x128xf32>
    %148 = arith.mulf %145, %147 : vector<8x128xf32>
    %cst_81 = arith.constant dense<0.000000e+00> : vector<128xf32>
    %149 = vector.multi_reduction <add>, %148, %cst_81 [0] : vector<8x128xf32> to vector<128xf32>
    %150 = vector.shape_cast %149 : vector<128xf32> to vector<1x128xf32>
    %151 = arith.mulf %19, %19 : vector<1x128xf32>
    %cst_82 = arith.constant 1.000000e-16 : f32
    %152 = vector.broadcast %cst_82 : f32 to vector<1x128xf32>
    %153 = arith.maximumf %151, %152 : vector<1x128xf32>
    %154 = math.rsqrt %153 : vector<1x128xf32>
    %155 = arith.mulf %150, %154 : vector<1x128xf32>
    %cst_83 = arith.constant 0.00497870706 : f32
    %156 = vector.broadcast %cst_83 : f32 to vector<1x128xf32>
    %157 = arith.mulf %156, %155 : vector<1x128xf32>
    %158 = arith.addf %143, %157 : vector<1x128xf32>
    %c0_84 = arith.constant 0 : index
    %c0_85 = arith.constant 0 : index
    %159 = vector.load %arg2[%c0_84, %c0_85] : memref<1x128xf32, #tpu.memory_space<vmem>>, vector<1x128xf32>
    tpu.vector_store %arg2[%c0_84, %c0_85], %158 {strides = array<i32>} : memref<1x128xf32, #tpu.memory_space<vmem>>, vector<1x128xf32>,
    return
  }
  func.func @transform_0(%arg0: i32) -> (i32, i32, i32) {
    %c0_i32 = arith.constant 0 : i32
    %c0_i32_0 = arith.constant 0 : i32
    %c0_i32_1 = arith.constant 0 : i32
    return %c0_i32, %c0_i32_0, %arg0 : i32, i32, i32
  }
  func.func @transform_1(%arg0: i32) -> (i32, i32) {
    %c0_i32 = arith.constant 0 : i32
    %c0_i32_0 = arith.constant 0 : i32
    return %c0_i32, %arg0 : i32, i32
  }
}

</mosaic_0001>

<llo_original>
// kernel: tpu_custom_call.1
$region0: #{tpu_custom_call.1}
  #allocation0 [shape = 'u32[]', space=smem, size = 0x4, offset = 0x4, fixed_abs, tag = 'smem constant byte address 0x4 - core index']
  #allocation1 [shape = 'u32[144,128]{1,0:T(1,128)}', space=vmem, size = 0x12000, scoped, tag = 'internal scratch']
  %s0 = inlined_call_operand.hbm [shape: f32[4,8,128], index: 0, kind: input, shape index: {}]
  %s1 = inlined_call_operand.hbm [shape: f32[1,128], index: 1, kind: output, shape index: {}]
  %s2 = sld [smem:[#allocation0]]
  $region18: #{tpu_custom_call.1} parent=0
    _
  %s4 = ssub.s32 1, %s2
  %s5 = scalar_select 0, %s4, %s2
  $region1: #{tpu_custom_call.1} parent=0
    #allocation2 [shape = 'u8[16384]{0}', space=vmem, size = 0x4000, scoped, tag = 'input window, operand 0, single buffered']
    #allocation3 [shape = 's32[1]{0}', space=sflag, size = 0x4, scoped, tag = 'scoped memory for tpu_custom_call.1']
    #allocation4 [shape = 's32[1]{0}', space=sflag, size = 0x4, scoped, tag = 'scoped memory for tpu_custom_call.1']
    #allocation5 [shape = 'u8[512]{0}', space=vmem, size = 0x400, scoped, tag = 'output window, operand 0, single buffered']
    %6 = vsyncpa [#allocation3], 0
    %7 = vsyncpa [#allocation4], 0
    // Predicated region
    $region2: #{tpu_custom_call.1} parent=1 // pred_check
      _
    $region3: #{tpu_custom_call.1} parent=1 // pred_check_branch
      %9 = sbr.rel (0) target = $region5
    $region4: #{tpu_custom_call.1} parent=1 // pred_region
      %s11 = ssub.s32 512, 512
      %12 = vsyncadd [#allocation3], %s11
      %s13 = sshll.u32 [#allocation2], 4
      %s14 = int_to_ptr.vmem [resolvable:$true] %s13
      %19 = dma.hbm_to_vmem [thread:$0]  %s0, 512, %s14, [#allocation3], 128, 128, 8
    $region5: #{tpu_custom_call.1} parent=1 // pred_fallthru
      _
    // Predicated region
    $region6: #{tpu_custom_call.1} parent=1 // pred_check
      _
    $region7: #{tpu_custom_call.1} parent=1 // pred_check_branch
      %21 = sbr.rel (0) target = $region9
    $region8: #{tpu_custom_call.1} parent=1 // pred_region
      %22 = dma.done [#allocation3], 512
    $region9: #{tpu_custom_call.1} parent=1 // pred_fallthru
      _
    %v23 = vld [vmem:[#allocation2] sm:$0xff]
    %v24 = vmul.f32 %v23, %v23
    %v25 = vrot.slane %v24, 4
    %v26 = vadd.f32 %v24, %v25
    %v27 = vrot.slane %v26, 2
    %v28 = vadd.f32 %v26, %v27
    %v29 = vrot.slane %v28, 1
    %v30 = vadd.f32 %v28, %v29
    %s31 = scalar_lea.vmem [#allocation2], 8
    %v32 = vld [vmem:[%s31] sm:$0xff]
    %v33 = vmul.f32 %v32, %v32
    %v34 = vrot.slane %v33, 4
    %v35 = vadd.f32 %v33, %v34
    %v36 = vrot.slane %v35, 2
    %v37 = vadd.f32 %v35, %v36
    %v38 = vrot.slane %v37, 1
    %v39 = vadd.f32 %v37, %v38
    %s40 = scalar_lea.vmem [#allocation2], 16
    %v41 = vld [vmem:[%s40] sm:$0xff]
    %v42 = vmul.f32 %v41, %v41
    %v43 = vrot.slane %v42, 4
    %v44 = vadd.f32 %v42, %v43
    %v45 = vrot.slane %v44, 2
    %v46 = vadd.f32 %v44, %v45
    %v47 = vrot.slane %v46, 1
    %v48 = vadd.f32 %v46, %v47
    %s49 = scalar_lea.vmem [#allocation2], 24
    %v50 = vld [vmem:[%s49] sm:$0xff]
    %v51 = vmul.f32 %v50, %v50
    %v52 = vrot.slane %v51, 4
    %v53 = vadd.f32 %v51, %v52
    %v54 = vrot.slane %v53, 2
    %v55 = vadd.f32 %v53, %v54
    %v56 = vrot.slane %v55, 1
    %v57 = vadd.f32 %v55, %v56
    %v58 = vmul.f32 %v30, %v30
    %v59 = vmax.f32 %v58, 1e-16
    %v60 = vrsqrt.pop %v59
    %v61 = vmul.f32 %v30, %v60
    %v62 = vmul.f32 %v61, 0.1
    %v63 = vadd.f32 %v62, 0.0
    %v64 = vmul.f32 %v23, %v32
    %v65 = vrot.slane %v64, 4
    %v66 = vadd.f32 %v64, %v65
    %v67 = vrot.slane %v66, 2
    %v68 = vadd.f32 %v66, %v67
    %v69 = vrot.slane %v68, 1
    %v70 = vadd.f32 %v68, %v69
    %v71 = vmul.f32 %v30, %v39
    %v72 = vmax.f32 %v71, 1e-16
    %v73 = vrsqrt.pop %v72
    %v74 = vmul.f32 %v70, %v73
    %v75 = vmul.f32 %v74, 0.036787946
    %v76 = vadd.f32 %v63, %v75
    %v77 = vmul.f32 %v23, %v41
    %v78 = vrot.slane %v77, 4
    %v79 = vadd.f32 %v77, %v78
    %v80 = vrot.slane %v79, 2
    %v81 = vadd.f32 %v79, %v80
    %v82 = vrot.slane %v81, 1
    %v83 = vadd.f32 %v81, %v82
    %v84 = vmul.f32 %v30, %v48
    %v85 = vmax.f32 %v84, 1e-16
    %v86 = vrsqrt.pop %v85
    %v87 = vmul.f32 %v83, %v86
    %v88 = vmul.f32 %v87, 0.013533528
    %v89 = vadd.f32 %v76, %v88
    %v90 = vmul.f32 %v23, %v50
    %v91 = vrot.slane %v90, 4
    %v92 = vadd.f32 %v90, %v91
    %v93 = vrot.slane %v92, 2
    %v94 = vadd.f32 %v92, %v93
    %v95 = vrot.slane %v94, 1
    %v96 = vadd.f32 %v94, %v95
    %v97 = vmul.f32 %v30, %v57
    %v98 = vmax.f32 %v97, 1e-16
    %v99 = vrsqrt.pop %v98
    %v100 = vmul.f32 %v96, %v99
    %v101 = vmul.f32 %v100, 0.004978707
    %v102 = vadd.f32 %v89, %v101
    %v103 = vmul.f32 %v39, %v39
    %v104 = vmax.f32 %v103, 1e-16
    %v105 = vrsqrt.pop %v104
    %v106 = vmul.f32 %v39, %v105
    %v107 = vmul.f32 %v106, 0.036787946
    %v108 = vadd.f32 %v102, %v107
    %v109 = vmul.f32 %v32, %v41
    %v110 = vrot.slane %v109, 4
    %v111 = vadd.f32 %v109, %v110
    %v112 = vrot.slane %v111, 2
    %v113 = vadd.f32 %v111, %v112
    %v114 = vrot.slane %v113, 1
    %v115 = vadd.f32 %v113, %v114
    %v116 = vmul.f32 %v39, %v48
    %v117 = vmax.f32 %v116, 1e-16
    %v118 = vrsqrt.pop %v117
    %v119 = vmul.f32 %v115, %v118
    %v120 = vmul.f32 %v119, 0.1
    %v121 = vadd.f32 %v108, %v120
    %v122 = vmul.f32 %v32, %v50
    %v123 = vrot.slane %v122, 4
    %v124 = vadd.f32 %v122, %v123
    %v125 = vrot.slane %v124, 2
    %v126 = vadd.f32 %v124, %v125
    %v127 = vrot.slane %v126, 1
    %v128 = vadd.f32 %v126, %v127
    %v129 = vmul.f32 %v39, %v57
    %v130 = vmax.f32 %v129, 1e-16
    %v131 = vrsqrt.pop %v130
    %v132 = vmul.f32 %v128, %v131
    %v133 = vmul.f32 %v132, 0.036787946
    %v134 = vadd.f32 %v121, %v133
    %v135 = vmul.f32 %v48, %v48
    %v136 = vmax.f32 %v135, 1e-16
    %v137 = vrsqrt.pop %v136
    %v138 = vmul.f32 %v48, %v137
    %v139 = vmul.f32 %v138, 0.013533528
    %v140 = vadd.f32 %v134, %v139
    %v141 = vmul.f32 %v41, %v50
    %v142 = vrot.slane %v141, 4
    %v143 = vadd.f32 %v141, %v142
    %v144 = vrot.slane %v143, 2
    %v145 = vadd.f32 %v143, %v144
    %v146 = vrot.slane %v145, 1
    %v147 = vadd.f32 %v145, %v146
    %v148 = vmul.f32 %v48, %v57
    %v149 = vmax.f32 %v148, 1e-16
    %v150 = vrsqrt.pop %v149
    %v151 = vmul.f32 %v147, %v150
    %v152 = vmul.f32 %v151, 0.036787946
    %v153 = vadd.f32 %v140, %v152
    %v154 = vmul.f32 %v57, %v57
    %v155 = vmax.f32 %v154, 1e-16
    %v156 = vrsqrt.pop %v155
    %v157 = vmul.f32 %v57, %v156
    %v158 = vmul.f32 %v157, 0.004978707
    %v159 = vadd.f32 %v153, %v158
    %160 = vst [vmem:[#allocation5] sm:$0x1] %v159
    // Predicated region
    $region10: #{tpu_custom_call.1} parent=1 // pred_check
      _
    $region11: #{tpu_custom_call.1} parent=1 // pred_check_branch
      %162 = sbr.rel (0) target = $region13
    $region12: #{tpu_custom_call.1} parent=1 // pred_region
      %s164 = ssub.s32 16, 16
      %165 = vsyncadd [#allocation4], %s164
      %s167 = sshll.u32 [#allocation5], 4
      %s168 = int_to_ptr.vmem [resolvable:$true] %s167
      %170 = dma.vmem_to_hbm [thread:$0]  %s168, 16, %s1, [#allocation4]
    $region13: #{tpu_custom_call.1} parent=1 // pred_fallthru
      _
    // Predicated region
    $region14: #{tpu_custom_call.1} parent=1 // pred_check
      _
    $region15: #{tpu_custom_call.1} parent=1 // pred_check_branch
      %172 = sbr.rel (0) target = $region17
    $region16: #{tpu_custom_call.1} parent=1 // pred_region
      %173 = dma.done [#allocation4], 16
    $region17: #{tpu_custom_call.1} parent=1 // pred_fallthru
      _
    %174 = vsyncpa [#allocation3], 1
    %175 = vsyncpa [#allocation4], 1

</llo_original>
